<compile_context>
chip_gen: v7x
topology: tpu7x:2x2x1
jax: 0.10.0
libtpu: 0.0.40
codegen_flags: <defaults>
</compile_context>

<pallas_src>
import functools
import math

import jax
import jax.numpy as jnp
from jax.experimental import pallas as pl
from jax.experimental.pallas import tpu as pltpu


# --------------------------------------------------------------------------
# PE table construction (pure parameter setup, identical math to __init__).
# --------------------------------------------------------------------------
def make_positional_table(max_len: int, d_model: int) -> jnp.ndarray:
    position = jnp.arange(max_len, dtype=jnp.float32)[:, None]          # (max_len, 1)
    div_term = jnp.exp(
        jnp.arange(0, d_model, 2, dtype=jnp.float32)
        * (-math.log(10000.0) / d_model)
    )                                                                    # (d_model/2,)
    angles = position * div_term                                         # (max_len, d_model/2)
    pe = jnp.zeros((max_len, d_model), dtype=jnp.float32)
    pe = pe.at[:, 0::2].set(jnp.sin(angles))
    pe = pe.at[:, 1::2].set(jnp.cos(angles))
    return pe                                                            # (max_len, d_model)


# --------------------------------------------------------------------------
# Fallback: plain XLA broadcast add (lets XLA fuse with neighboring ops).
# --------------------------------------------------------------------------
def _xla_add(x: jnp.ndarray, pe_table: jnp.ndarray) -> jnp.ndarray:
    S = x.shape[0]
    return x + pe_table[:S].astype(x.dtype)[:, None, :]


# --------------------------------------------------------------------------
# Kernel: lane-dense broadcast add.
#   x_ref : (tS, tB*D)   pe_ref : (tS, D)   o_ref : (tS, tB*D)
# --------------------------------------------------------------------------
def _pe_add_kernel(x_ref, pe_ref, o_ref, *, batch_per_block: int, d_model: int):
    pe = pe_ref[...]                               # loaded once per grid step
    for b in range(batch_per_block):               # static slices: zero-cost views
        sl = slice(b * d_model, (b + 1) * d_model)
        o_ref[:, sl] = x_ref[:, sl] + pe           # unmasked vst (D % 128 == 0)


# --------------------------------------------------------------------------
# Generation-aware budgets.
# --------------------------------------------------------------------------
def _hw_params():
    vmem_cap = None
    try:
        vmem_cap = pltpu.get_tpu_info().vmem_capacity_bytes
    except Exception:
        vmem_cap = None
    if vmem_cap is not None and vmem_cap > (96 << 20):
        # v5e / v6e class: 128 MiB VMEM, single TensorCore per chip.
        return dict(target_bytes=12 << 20, vmem_limit_bytes=80 << 20, min_steps=1)
    # v7x class (64 MiB VMEM per TC, 2 TCs) or unknown: conservative budgets,
    # and require >= 2 grid steps so both TensorCores get work.
    return dict(target_bytes=6 << 20, vmem_limit_bytes=40 << 20, min_steps=2)


def _select_tiles(S, B, D, itemsize, target_bytes, vmem_limit_bytes, min_steps):
    """Pick (tS rows, tB batches) per grid step; None => fall back to XLA."""
    row_align = max(8, 32 // itemsize)         # 8 rows f32, 16 bf16, 32 int8
    budget = int(vmem_limit_bytes * 0.75)      # headroom for compiler scratch

    def step_bytes(ts, tb):
        # double-buffered (x tile + out tile + pe tile)
        return 2 * ts * D * itemsize * (2 * tb + 1)

    min_ts = min(S, row_align)

    # Largest divisor of B whose minimal tile fits the VMEM budget.
    tb = None
    for cand in range(B, 0, -1):
        if B % cand == 0 and step_bytes(min_ts, cand) <= budget:
            tb = cand
            break
    if tb is None:
        return None                            # even (min_ts, 1) doesn't fit

    # Rows per step: as close to target_bytes of x-tile as the budget allows.
    row_bytes = tb * D * itemsize
    ts = max(1, target_bytes // row_bytes)
    ts_cap = budget // (2 * D * itemsize * (2 * tb + 1))
    ts = min(ts, max(1, ts_cap))
    if ts >= S:
        ts = S                                 # full extent: always legal
    else:
        ts = max(row_align, (ts // row_align) * row_align)
        # Prefer a tile that divides S (avoids a ragged, masked last block).
        if S % ts != 0:
            c = ts
            lo = max(row_align, ts // 2)
            while c >= lo:
                if S % c == 0:
                    ts = c
                    break
                c -= row_align

    # Megacore: ensure >= min_steps grid steps when S is splittable.
    if min_steps > 1 and pl.cdiv(S, ts) * (B // tb) < min_steps and S > row_align:
        half = -(-S // min_steps)                          # ceil(S / min_steps)
        half = -(-half // row_align) * row_align           # round up to alignment
        ts = min(ts, max(row_align, half))

    ts = min(ts, S)
    return ts, tb


# --------------------------------------------------------------------------
# Pallas path.
# --------------------------------------------------------------------------
def positional_encoding_pallas(
    x: jnp.ndarray,
    pe_table: jnp.ndarray,
    *,
    target_bytes: int | None = None,
    vmem_limit_bytes: int | None = None,
    donate: bool = False,
) -> jnp.ndarray:
    """x: (S, B, D).  Returns x + pe_table[:S] broadcast over B (eval mode)."""
    S, B, D = x.shape
    assert S <= pe_table.shape[0], "sequence longer than max_len of PE table"

    # Lane-density guard: only take the Pallas path when output stores are
    # unmasked (D a multiple of 128).  Otherwise the fused XLA add is faster.
    if D % 128 != 0:
        return _xla_add(x, pe_table)

    hw = _hw_params()
    if target_bytes is None:
        target_bytes = hw["target_bytes"]
    if vmem_limit_bytes is None:
        vmem_limit_bytes = hw["vmem_limit_bytes"]

    itemsize = x.dtype.itemsize
    tiles = _select_tiles(S, B, D, itemsize, target_bytes, vmem_limit_bytes,
                          hw["min_steps"])
    if tiles is None:
        return _xla_add(x, pe_table)           # graceful fallback, no OOM
    tS, tB = tiles

    pe = pe_table[:S].astype(x.dtype)          # (S, D) static slice
    x2 = x.reshape(S, B * D)                   # free contiguous reshape

    grid = (pl.cdiv(S, tS), B // tB)
    cost = pl.CostEstimate(
        flops=x.size,
        transcendentals=0,
        bytes_accessed=2 * x.size * itemsize + pe.size * itemsize,
    )

    extra = {}
    if donate:
        extra["input_output_aliases"] = {0: 0}   # alias x2 buffer to the output

    out = pl.pallas_call(
        functools.partial(_pe_add_kernel, batch_per_block=tB, d_model=D),
        out_shape=jax.ShapeDtypeStruct((S, B * D), x.dtype),
        grid=grid,
        in_specs=[
            pl.BlockSpec((tS, tB * D), lambda i, j: (i, j)),
            pl.BlockSpec((tS, D), lambda i, j: (i, 0)),
        ],
        out_specs=pl.BlockSpec((tS, tB * D), lambda i, j: (i, j)),
        compiler_params=pltpu.CompilerParams(
            dimension_semantics=("parallel", "parallel"),
            vmem_limit_bytes=vmem_limit_bytes,
        ),
        cost_estimate=cost,
        **extra,
    )(x2, pe)

    return out.reshape(S, B, D)


# --------------------------------------------------------------------------
# Dispatcher: matches the module's forward (eval mode).
# --------------------------------------------------------------------------
def positional_encoding(
    x: jnp.ndarray,
    pe_table: jnp.ndarray,
    *,
    training: bool = False,
    min_pallas_bytes: int = 4 << 20,
) -> jnp.ndarray:
    if training:
        # TODO(synk): training-mode dropout (p=0.1) not implemented in Pallas.
        raise NotImplementedError("training-mode dropout not supported")
    S, B, D = x.shape
    small = x.size * x.dtype.itemsize < min_pallas_bytes
    lane_sparse = (D % 128 != 0)
    if small or lane_sparse:
        # Tiny or lane-sparse: the fused XLA add wins (and can fuse with
        # neighboring elementwise ops, saving a full extra read+write of x).
        return _xla_add(x, pe_table)
    return positional_encoding_pallas(x, pe_table)


if __name__ == "__main__":
    MAX_LEN = 5000
    key = jax.random.PRNGKey(0)

    # --- module-implied tiny shape: seq=8, batch=2, d_model=32 -------------
    # Lane-sparse (D=32 < 128): dispatcher uses the fused XLA add.
    S, B, D = 8, 2, 32
    pe_table = make_positional_table(MAX_LEN, D)
    x = jax.random.normal(key, (S, B, D), dtype=jnp.float32)
    out_small = jax.block_until_ready(positional_encoding(x, pe_table))
    ref_small = x + pe_table[:S][:, None, :]
    assert out_small.shape == (S, B, D)
    assert jnp.allclose(out_small, ref_small, atol=1e-6, rtol=1e-6)

    # --- lane-dense shape (D multiple of 128): exercises the Pallas kernel -
    S1, B1, D1 = 64, 2, 128
    pe_table1 = make_positional_table(MAX_LEN, D1)
    x1 = jax.random.normal(jax.random.PRNGKey(1), (S1, B1, D1), dtype=jnp.float32)
    out1 = jax.block_until_ready(positional_encoding_pallas(x1, pe_table1))
    ref1 = x1 + pe_table1[:S1][:, None, :]
    assert out1.shape == (S1, B1, D1)
    assert jnp.allclose(out1, ref1, atol=1e-6, rtol=1e-6)

    # --- forced-small tiles: exercises the multi-step pipelined grid path --
    S2, B2, D2 = 256, 2, 128
    pe_table2 = make_positional_table(MAX_LEN, D2)
    x2 = jax.random.normal(jax.random.PRNGKey(2), (S2, B2, D2), dtype=jnp.float32)
    out2 = jax.block_until_ready(
        positional_encoding_pallas(x2, pe_table2, target_bytes=64 * 1024)
    )
    ref2 = x2 + pe_table2[:S2][:, None, :]
    assert jnp.allclose(out2, ref2, atol=1e-6, rtol=1e-6)

    print("KERNEL_OK")
</pallas_src>

<mosaic_0001>
module attributes {stable_mosaic.version = 11 : i64} {
  func.func @_pe_add_kernel(%arg0: i32, %arg1: i32, %arg2: memref<32x256xf32, #tpu.memory_space<vmem>>, %arg3: memref<32x128xf32, #tpu.memory_space<vmem>>, %arg4: memref<32x256xf32, #tpu.memory_space<vmem>>) attributes {dimension_semantics = [#tpu.dimension_semantics<parallel>, #tpu.dimension_semantics<parallel>], iteration_bounds = array<i64: 2, 1>, scalar_prefetch = 0 : i64, scratch_operands = 0 : i64, tpu.core_type = #tpu.core_type<tc>, window_params = [{transform_indices = @transform_0, window_bounds = array<i64: 32, 256>}, {transform_indices = @transform_1, window_bounds = array<i64: 32, 128>}, {transform_indices = @transform_2, window_bounds = array<i64: 32, 256>}]} {
    %c0 = arith.constant 0 : index
    %c0_0 = arith.constant 0 : index
    %0 = vector.load %arg3[%c0, %c0_0] : memref<32x128xf32, #tpu.memory_space<vmem>>, vector<32x128xf32>
    %c0_1 = arith.constant 0 : index
    %c0_2 = arith.constant 0 : index
    %1 = vector.load %arg2[%c0_1, %c0_2] : memref<32x256xf32, #tpu.memory_space<vmem>>, vector<32x128xf32>
    %2 = arith.addf %1, %0 : vector<32x128xf32>
    %c0_3 = arith.constant 0 : index
    %c0_4 = arith.constant 0 : index
    %3 = vector.load %arg4[%c0_3, %c0_4] : memref<32x256xf32, #tpu.memory_space<vmem>>, vector<32x128xf32>
    tpu.vector_store %arg4[%c0_3, %c0_4], %2 {strides = array<i32>} : memref<32x256xf32, #tpu.memory_space<vmem>>, vector<32x128xf32>,
    %c0_5 = arith.constant 0 : index
    %c128 = arith.constant 128 : index
    %4 = vector.load %arg2[%c0_5, %c128] : memref<32x256xf32, #tpu.memory_space<vmem>>, vector<32x128xf32>
    %5 = arith.addf %4, %0 : vector<32x128xf32>
    %c0_6 = arith.constant 0 : index
    %c128_7 = arith.constant 128 : index
    %6 = vector.load %arg4[%c0_6, %c128_7] : memref<32x256xf32, #tpu.memory_space<vmem>>, vector<32x128xf32>
    tpu.vector_store %arg4[%c0_6, %c128_7], %5 {strides = array<i32>} : memref<32x256xf32, #tpu.memory_space<vmem>>, vector<32x128xf32>,
    return
  }
  func.func @transform_0(%arg0: i32, %arg1: i32) -> (i32, i32) {
    %c0_i32 = arith.constant 0 : i32
    return %arg0, %arg1 : i32, i32
  }
  func.func @transform_1(%arg0: i32, %arg1: i32) -> (i32, i32) {
    %c0_i32 = arith.constant 0 : i32
    %c0_i32_0 = arith.constant 0 : i32
    return %arg0, %c0_i32 : i32, i32
  }
  func.func @transform_2(%arg0: i32, %arg1: i32) -> (i32, i32) {
    %c0_i32 = arith.constant 0 : i32
    return %arg0, %arg1 : i32, i32
  }
}

</mosaic_0001>

<llo_original>
// kernel: tpu_custom_call.1
$region0: #{tpu_custom_call.1}
  #allocation0 [shape = 'u32[]', space=smem, size = 0x4, offset = 0x4, fixed_abs, tag = 'smem constant byte address 0x4 - core index']
  #allocation1 [shape = 'u32[144,128]{1,0:T(1,128)}', space=vmem, size = 0x12000, scoped, tag = 'internal scratch']
  %s0 = inlined_call_operand.hbm [shape: f32[64,256], index: 0, kind: input, shape index: {}]
  %s1 = inlined_call_operand.hbm [shape: f32[64,128], index: 1, kind: input, shape index: {}]
  %s2 = inlined_call_operand.hbm [shape: f32[64,256], index: 2, kind: output, shape index: {}]
  %s3 = sld [smem:[#allocation0]]
  $region49: #{tpu_custom_call.1} parent=0
    _
  %s5 = ssub.s32 1, %s3
  %s6 = scalar_select 0, %s5, %s3
  $region1: #{tpu_custom_call.1} parent=0
    #allocation2 [shape = 'u8[65536]{0}', space=vmem, size = 0x10000, scoped, tag = 'input window, operand 0']
    #allocation3 [shape = 's32[2]{0}', space=sflag, size = 0x8, scoped, tag = 'scoped memory for tpu_custom_call.1']
    #allocation4 [shape = 's32[2]{0}', space=sflag, size = 0x8, scoped, tag = 'scoped memory for tpu_custom_call.1']
    #allocation5 [shape = 'u8[32768]{0}', space=vmem, size = 0x8000, scoped, tag = 'input window, operand 1']
    #allocation6 [shape = 's32[2]{0}', space=sflag, size = 0x8, scoped, tag = 'scoped memory for tpu_custom_call.1']
    #allocation7 [shape = 'u8[65536]{0}', space=vmem, size = 0x10000, scoped, tag = 'output window, operand 0']
    %7 = vsyncpa [#allocation3], 0
    %s8 = scalar_lea.sflag [#allocation3], 1
    %9 = vsyncpa %s8, 0
    %10 = vsyncpa [#allocation6], 0
    %s11 = scalar_lea.sflag [#allocation6], 1
    %12 = vsyncpa %s11, 0
    %13 = vsyncpa [#allocation4], 0
    %s14 = scalar_lea.sflag [#allocation4], 1
    %15 = vsyncpa %s14, 0
    loop: start=0, step=1, limit=4
    $region2: #{tpu_custom_call.1} parent=1 // loop_pre_header
      _
    $region3: #{tpu_custom_call.1} parent=1 // loop_header
      %s17 = sphi 0, %s21
      %p18 = scmp.ge.s32.totalorder %s17, 4
      %s24 = sphi 0, %s36
      %s25 = sphi 0, %s32
      %s26 = sphi 0, %s24
      %s27 = sphi 0, %s25
      %s28 = sphi 0, %s26
      %s29 = sphi 0, %s27
      %s41 = sphi 0, %s43
      %s44 = sphi 0, %s41
      %s45 = sphi 0, %s44
      %s61 = sphi 0, %s45
      %s67 = sphi 0, %s69
      %s70 = sphi 0, %s67
      %s71 = sphi 0, %s70
      %s87 = sphi 0, %s71
      %s95 = sphi 0, %s97
      %s98 = sphi 0, %s95
      %s99 = sphi 0, %s98
      %s115 = sphi 0, %s99
    $region4: #{tpu_custom_call.1} parent=1 // loop_header_branch
      %20 = sbr.rel (%p18) target = $region8
    $region5: #{tpu_custom_call.1} parent=1 // loop_body
      %s22 = ssub.s32 %s17, 1
      %s23 = ssub.s32 %s17, 2
      %s30 = sadd.s32 1, %s25
      %p31 = scmp.ge.s32.totalorder %s30, 1
      %s32 = scalar_select %p31, 0, %s30
      %s33 = sadd.s32 1, %s24
      %s34 = scalar_select %p31, %s33, %s24
      %p35 = scmp.ge.s32.totalorder %s34, 2
      %s36 = scalar_select %p35, 0, %s34
      %s37 = ssub.s32 %s24, %s36
      %s38 = ssub.s32 %s25, %s32
      %s39 = sor.u32 %s37, %s38
      %p40 = scmp.eq.s32.totalorder %s39, 0
      %s42 = sadd.s32 %s41, 1
      %s43 = scalar_select %p40, %s41, %s42
      %p46 = pneg %p40
      %p47 = scmp.eq.s32.totalorder %s17, 1
      %p48 = por %p46, %p47
      %p49 = scmp.ne.s32.totalorder %s41, %s44
      %p50 = scmp.eq.s32.totalorder %s17, 0
      %p51 = por %p49, %p50
      %p52 = scmp.ne.s32.totalorder %s41, %s44
      %p53 = scmp.eq.s32.totalorder %s22, 1
      %p54 = por %p52, %p53
      %p55 = scmp.ne.s32.totalorder %s44, %s45
      %p56 = scmp.eq.s32.totalorder %s22, 0
      %p57 = por %p55, %p56
      %p58 = scmp.ne.s32.totalorder %s44, %s45
      %p59 = scmp.eq.s32.totalorder %s23, 1
      %p60 = por %p58, %p59
      %p62 = scmp.ne.s32.totalorder %s45, %s61
      %p63 = scmp.eq.s32.totalorder %s23, 0
      %p64 = por %p62, %p63
      %s65 = ssub.s32 %s24, %s36
      %p66 = scmp.eq.s32.totalorder %s65, 0
      %s68 = sadd.s32 %s67, 1
      %s69 = scalar_select %p66, %s67, %s68
      %p72 = pneg %p66
      %p73 = scmp.eq.s32.totalorder %s17, 1
      %p74 = por %p72, %p73
      %p75 = scmp.ne.s32.totalorder %s67, %s70
      %p76 = scmp.eq.s32.totalorder %s17, 0
      %p77 = por %p75, %p76
      %p78 = scmp.ne.s32.totalorder %s67, %s70
      %p79 = scmp.eq.s32.totalorder %s22, 1
      %p80 = por %p78, %p79
      %p81 = scmp.ne.s32.totalorder %s70, %s71
      %p82 = scmp.eq.s32.totalorder %s22, 0
      %p83 = por %p81, %p82
      %p84 = scmp.ne.s32.totalorder %s70, %s71
      %p85 = scmp.eq.s32.totalorder %s23, 1
      %p86 = por %p84, %p85
      %p88 = scmp.ne.s32.totalorder %s71, %s87
      %p89 = scmp.eq.s32.totalorder %s23, 0
      %p90 = por %p88, %p89
      %s91 = ssub.s32 %s24, %s36
      %s92 = ssub.s32 %s25, %s32
      %s93 = sor.u32 %s91, %s92
      %p94 = scmp.eq.s32.totalorder %s93, 0
      %s96 = sadd.s32 %s95, 1
      %s97 = scalar_select %p94, %s95, %s96
      %p100 = pneg %p94
      %p101 = scmp.eq.s32.totalorder %s17, 1
      %p102 = por %p100, %p101
      %p103 = scmp.ne.s32.totalorder %s95, %s98
      %p104 = scmp.eq.s32.totalorder %s17, 0
      %p105 = por %p103, %p104
      %p106 = scmp.ne.s32.totalorder %s95, %s98
      %p107 = scmp.eq.s32.totalorder %s22, 1
      %p108 = por %p106, %p107
      %p109 = scmp.ne.s32.totalorder %s98, %s99
      %p110 = scmp.eq.s32.totalorder %s22, 0
      %p111 = por %p109, %p110
      %p112 = scmp.ne.s32.totalorder %s98, %s99
      %p113 = scmp.eq.s32.totalorder %s23, 1
      %p114 = por %p112, %p113
      %p116 = scmp.ne.s32.totalorder %s99, %s115
      %p117 = scmp.eq.s32.totalorder %s23, 0
      %p118 = por %p116, %p117
      %p119 = scmp.le.s32.totalorder 1, %s17
      %p120 = scmp.lt.s32.totalorder %s17, 3
      %p121 = pnand %p119, %p120
      %p122 = pneg %p121
      // Predicated region
      $region9: #{tpu_custom_call.1} parent=5 // pred_check
        _
      $region10: #{tpu_custom_call.1} parent=5 // pred_check_branch
        %124 = sbr.rel (%p121) target = $region12
      $region11: #{tpu_custom_call.1} parent=5 // pred_region
        %s125 = ssub.s32 %s17, 1
      $region12: #{tpu_custom_call.1} parent=5 // pred_fallthru
        _
      %p126 = scmp.lt.s32.totalorder %s17, 2
      // Predicated region
      $region13: #{tpu_custom_call.1} parent=5 // pred_check
        %p127 = pneg %p126
      $region14: #{tpu_custom_call.1} parent=5 // pred_check_branch
        %129 = sbr.rel (%p127) target = $region16
      $region15: #{tpu_custom_call.1} parent=5 // pred_region
        // Predicated region
        $region17: #{tpu_custom_call.1} parent=15 // pred_check
          %p130 = pneg %p51
        $region18: #{tpu_custom_call.1} parent=15 // pred_check_branch
          %132 = sbr.rel (%p130) target = $region20
        $region19: #{tpu_custom_call.1} parent=15 // pred_region
          %s133 = sand.u32 %s41, 1
          %s134 = scalar_lea.sflag [#allocation3], %s133
          %s135 = sand.u32 %s41, 1
          %s136 = smul.addr %s135, 64
          %s137 = scalar_lea.vmem [#allocation2], %s136
          %s138 = smul.u32 4, %s24
          %s139 = smul.u32 2, %s25
          %s141 = ssub.s32 1024, 1024
          %142 = vsyncadd %s134, %s141
          %s143 = smul.addr %s138, 2
          %s144 = sadd.s32 %s139, %s143
          %s145 = smul.addr %s144, 128
          %s146 = scalar_lea.hbm %s0, %s145
          %s147 = sshll.u32 %s137, 4
          %s148 = int_to_ptr.vmem [resolvable:$true] %s147
          %153 = dma.hbm_to_vmem [thread:$0]  %s146, 1024, %s148, %s134, 256, 256, 16
        $region20: #{tpu_custom_call.1} parent=15 // pred_fallthru
          _
        // Predicated region
        $region21: #{tpu_custom_call.1} parent=15 // pred_check
          %p154 = pneg %p77
        $region22: #{tpu_custom_call.1} parent=15 // pred_check_branch
          %156 = sbr.rel (%p154) target = $region24
        $region23: #{tpu_custom_call.1} parent=15 // pred_region
          %s157 = sand.u32 %s67, 1
          %s158 = scalar_lea.sflag [#allocation6], %s157
          %s159 = sand.u32 %s67, 1
          %s160 = smul.addr %s159, 32
          %s161 = scalar_lea.vmem [#allocation5], %s160
          %s162 = smul.u32 4, %s24
          %s164 = ssub.s32 512, 512
          %165 = vsyncadd %s158, %s164
          %s166 = smul.addr %s162, 128
          %s167 = scalar_lea.hbm %s1, %s166
          %s168 = sshll.u32 %s161, 4
          %s169 = int_to_ptr.vmem [resolvable:$true] %s168
          %174 = dma.hbm_to_vmem [thread:$0]  %s167, 512, %s169, %s158, 128, 128, 8
        $region24: #{tpu_custom_call.1} parent=15 // pred_fallthru
          _
      $region16: #{tpu_custom_call.1} parent=5 // pred_fallthru
        _
      %p175 = scmp.le.s32.totalorder 1, %s17
      %p176 = scmp.lt.s32.totalorder %s17, 3
      %p177 = pnand %p175, %p176
      %p178 = pneg %p177
      // Predicated region
      $region25: #{tpu_custom_call.1} parent=5 // pred_check
        _
      $region26: #{tpu_custom_call.1} parent=5 // pred_check_branch
        %180 = sbr.rel (%p177) target = $region28
      $region27: #{tpu_custom_call.1} parent=5 // pred_region
        %s181 = ssub.s32 %s17, 1
        %s182 = sand.u32 %s44, 1
        %s183 = scalar_lea.sflag [#allocation3], %s182
        %s184 = sand.u32 %s44, 1
        %s185 = smul.addr %s184, 64
        %s186 = scalar_lea.vmem [#allocation2], %s185
        // Predicated region
        $region29: #{tpu_custom_call.1} parent=27 // pred_check
          %p187 = pneg %p57
        $region30: #{tpu_custom_call.1} parent=27 // pred_check_branch
          %189 = sbr.rel (%p187) target = $region32
        $region31: #{tpu_custom_call.1} parent=27 // pred_region
          %190 = dma.done %s183, 1024
        $region32: #{tpu_custom_call.1} parent=27 // pred_fallthru
          _
        %s191 = sand.u32 %s70, 1
        %s192 = scalar_lea.sflag [#allocation6], %s191
        %s193 = sand.u32 %s70, 1
        %s194 = smul.addr %s193, 32
        %s195 = scalar_lea.vmem [#allocation5], %s194
        // Predicated region
        $region33: #{tpu_custom_call.1} parent=27 // pred_check
          %p196 = pneg %p83
        $region34: #{tpu_custom_call.1} parent=27 // pred_check_branch
          %198 = sbr.rel (%p196) target = $region36
        $region35: #{tpu_custom_call.1} parent=27 // pred_region
          %199 = dma.done %s192, 512
        $region36: #{tpu_custom_call.1} parent=27 // pred_fallthru
          _
        %s200 = sand.u32 %s44, 1
        %s201 = scalar_lea.sflag [#allocation3], %s200
        %s202 = sand.u32 %s44, 1
        %s203 = smul.addr %s202, 64
        %s204 = scalar_lea.vmem [#allocation2], %s203
        %p205 = pneg %p57
        %p206 = pneg %p54
        %s207 = sand.u32 %s70, 1
        %s208 = scalar_lea.sflag [#allocation6], %s207
        %s209 = sand.u32 %s70, 1
        %s210 = smul.addr %s209, 32
        %s211 = scalar_lea.vmem [#allocation5], %s210
        %p212 = pneg %p83
        %p213 = pneg %p80
        %p214 = pneg %p111
        %p215 = pneg %p108
        %s216 = sand.u32 %s98, 1
        %s217 = scalar_lea.sflag [#allocation4], %s216
        %s218 = sand.u32 %s98, 1
        %s219 = smul.addr %s218, 64
        %s220 = scalar_lea.vmem [#allocation7], %s219
        %s221 = smul.u32 4, %s26
        %s222 = smul.u32 2, %s27
        %s223 = smul.u32 4, %s26
        %s224 = smul.u32 4, %s26
        %s225 = smul.u32 2, %s27
        %v226 = vld [vmem:[%s195] sm:$0xff]
        %v227 = vld [vmem:[%s195 + $0x8] sm:$0xff]
        %v228 = vld [vmem:[%s195 + $0x10] sm:$0xff]
        %v229 = vld [vmem:[%s195 + $0x18] sm:$0xff]
        %v230 = vld [vmem:[%s186] sm:$0xff]
        %v231 = vld [vmem:[%s186 + $0x10] sm:$0xff]
        %v232 = vld [vmem:[%s186 + $0x20] sm:$0xff]
        %v233 = vld [vmem:[%s186 + $0x30] sm:$0xff]
        %v234 = vadd.f32 %v230, %v226
        %v235 = vadd.f32 %v231, %v227
        %v236 = vadd.f32 %v232, %v228
        %v237 = vadd.f32 %v233, %v229
        %238 = vst [vmem:[%s220] sm:$0xff] %v234
        %239 = vst [vmem:[%s220 + $0x10] sm:$0xff] %v235
        %240 = vst [vmem:[%s220 + $0x20] sm:$0xff] %v236
        %241 = vst [vmem:[%s220 + $0x30] sm:$0xff] %v237
        %v242 = vld [vmem:[%s186 + $0x8] sm:$0xff]
        %v243 = vld [vmem:[%s186 + $0x18] sm:$0xff]
        %v244 = vld [vmem:[%s186 + $0x28] sm:$0xff]
        %v245 = vld [vmem:[%s186 + $0x38] sm:$0xff]
        %v246 = vadd.f32 %v242, %v226
        %v247 = vadd.f32 %v243, %v227
        %v248 = vadd.f32 %v244, %v228
        %v249 = vadd.f32 %v245, %v229
        %250 = vst [vmem:[%s220 + $0x8] sm:$0xff] %v246
        %251 = vst [vmem:[%s220 + $0x18] sm:$0xff] %v247
        %252 = vst [vmem:[%s220 + $0x28] sm:$0xff] %v248
        %253 = vst [vmem:[%s220 + $0x38] sm:$0xff] %v249
        %s254 = sand.u32 %s98, 1
        %s255 = scalar_lea.sflag [#allocation4], %s254
        %s256 = sand.u32 %s98, 1
        %s257 = smul.addr %s256, 64
        %s258 = scalar_lea.vmem [#allocation7], %s257
        // Predicated region
        $region37: #{tpu_custom_call.1} parent=27 // pred_check
          %p259 = pneg %p108
        $region38: #{tpu_custom_call.1} parent=27 // pred_check_branch
          %261 = sbr.rel (%p259) target = $region40
        $region39: #{tpu_custom_call.1} parent=27 // pred_region
          %s262 = smul.u32 4, %s26
          %s263 = smul.u32 2, %s27
          %s265 = ssub.s32 1024, 1024
          %266 = vsyncadd %s255, %s265
          %s267 = smul.addr %s262, 2
          %s268 = sadd.s32 %s263, %s267
          %s269 = smul.addr %s268, 128
          %s270 = scalar_lea.hbm %s2, %s269
          %s271 = sshll.u32 %s258, 4
          %s272 = int_to_ptr.vmem [resolvable:$true] %s271
          %277 = dma.vmem_to_hbm [thread:$0]  %s272, 1024, %s270, %s255, 256, 256, 16
        $region40: #{tpu_custom_call.1} parent=27 // pred_fallthru
          _
      $region28: #{tpu_custom_call.1} parent=5 // pred_fallthru
        _
      %p278 = scmp.le.s32.totalorder 2, %s17
      // Predicated region
      $region41: #{tpu_custom_call.1} parent=5 // pred_check
        %p279 = pneg %p278
      $region42: #{tpu_custom_call.1} parent=5 // pred_check_branch
        %281 = sbr.rel (%p279) target = $region44
      $region43: #{tpu_custom_call.1} parent=5 // pred_region
        %s282 = ssub.s32 %s17, 2
        // Predicated region
        $region45: #{tpu_custom_call.1} parent=43 // pred_check
          %p283 = pneg %p114
        $region46: #{tpu_custom_call.1} parent=43 // pred_check_branch
          %285 = sbr.rel (%p283) target = $region48
        $region47: #{tpu_custom_call.1} parent=43 // pred_region
          %s286 = sand.u32 %s99, 1
          %s287 = scalar_lea.sflag [#allocation4], %s286
          %s288 = sand.u32 %s99, 1
          %s289 = smul.addr %s288, 64
          %s290 = scalar_lea.vmem [#allocation7], %s289
          %291 = dma.done %s287, 1024
        $region48: #{tpu_custom_call.1} parent=43 // pred_fallthru
          _
      $region44: #{tpu_custom_call.1} parent=5 // pred_fallthru
        _
    $region6: #{tpu_custom_call.1} parent=1 // loop_footer
      %s21 = sadd.s32 1, %s17
    $region7: #{tpu_custom_call.1} parent=1 // loop_footer_branch
      %16 = sbr.rel target = $region3
    $region8: #{tpu_custom_call.1} parent=1 // loop_exit
      _
    %292 = vsyncpa [#allocation3], 1
    %s293 = scalar_lea.sflag [#allocation3], 1
    %294 = vsyncpa %s293, 1
    %295 = vsyncpa [#allocation6], 1
    %s296 = scalar_lea.sflag [#allocation6], 1
    %297 = vsyncpa %s296, 1
    %298 = vsyncpa [#allocation4], 1
    %s299 = scalar_lea.sflag [#allocation4], 1
    %300 = vsyncpa %s299, 1

</llo_original>
